<compile_context>
chip_gen: v7x
topology: tpu7x:2x2x1
jax: 0.10.0
libtpu: 0.0.40
codegen_flags: <defaults>
</compile_context>

<pallas_src>
import functools

import jax
import jax.numpy as jnp
from jax.experimental import pallas as pl
from jax.experimental.pallas import tpu as pltpu

_LANE = 128
_SUBLANE = 8
_UNROLL = 4          # modest unroll of the per-fold loop on the fast (unmasked) path


def _chip_defaults():
    """(tile_rows, n_split, vmem_limit_bytes) per TPU generation.

    Correctness never depends on these; they only steer tiling and the core split.
    """
    try:
        kind = jax.devices()[0].device_kind.lower()
    except Exception:
        kind = ""
    if "v6" in kind:
        # 128 MiB physical VMEM; 4 inputs x 2 buffers x 2 MiB = 16 MiB of blocks.
        # Raise the scoped limit over the 32 MiB default for headroom.
        return 4096, 1, 64 * 1024 * 1024
    if "v7" in kind or "tpu7" in kind:
        # 2 TensorCores/chip share 3.2 TB/s HBM; split the row stream across them.
        # Cap tile at 4096 (16 MiB double-buffered) under the 64 MiB physical VMEM.
        return 4096, 2, None
    # v5e (16 MiB scoped-VMEM default), v5p, v4, unknown: conservative settings.
    return 2048, 1, None


def _make_dice_kernel(num_preds, tile_rows, rows_total, tiles_per_core, unroll):
    """Accumulate, per pred q: sum(p_q*l), sum(p_q); plus sum(l) (shared)."""
    folds = tile_rows // _SUBLANE
    n_acc = 2 * num_preds + 1

    def kernel(*refs):
        pred_refs = refs[:num_preds]
        l_ref = refs[num_preds]
        out_ref = refs[num_preds + 1]          # (1, 2P+1, 8, 128) accumulator block

        c = pl.program_id(0)                   # core split (parallel)
        i = pl.program_id(1)                   # row-block reduction (arbitrary)

        @pl.when(i == 0)
        def _():
            out_ref[...] = jnp.zeros_like(out_ref)

        # First global row covered by this (c, i) step.  Must stay consistent with
        # the clamped data_map in _dice_partial_sums: a clamped (out-of-range) step
        # has row0 >= rows_total, so the masked path below zeroes its contribution.
        row0 = (c * tiles_per_core + i) * tile_rows

        def accumulate(masked):
            # fori_loop over (8,128) sublane folds with vreg-resident accumulator
            # carries: labels chunk loaded once per fold and reused for every pred;
            # no (tile_rows, 128) block-sized temporaries are ever materialized.
            def body(f, accs):
                base = pl.multiple_of(f * _SUBLANE, _SUBLANE)
                lz = l_ref[pl.ds(base, _SUBLANE), :].astype(jnp.float32)
                if masked:
                    rid = (jax.lax.broadcasted_iota(jnp.int32, (_SUBLANE, _LANE), 0)
                           + (row0 + base))
                    keep = rid < rows_total
                    # OOB/garbage rows only ever feed these selects.
                    lz = jnp.where(keep, lz, 0.0)
                new = [accs[0] + lz]
                for q in range(num_preds):
                    pz = pred_refs[q][pl.ds(base, _SUBLANE), :].astype(jnp.float32)
                    if masked:
                        pz = jnp.where(keep, pz, 0.0)
                    new.append(accs[1 + 2 * q] + pz * lz)    # intersection partial
                    new.append(accs[2 + 2 * q] + pz)         # sum(pred) partial
                return tuple(new)

            init = tuple(jnp.zeros((_SUBLANE, _LANE), jnp.float32)
                         for _ in range(n_acc))
            accs = jax.lax.fori_loop(0, folds, body, init,
                                     unroll=1 if masked else unroll)
            out_ref[0, 2 * num_preds] += accs[0]
            for q in range(num_preds):
                out_ref[0, 2 * q] += accs[1 + 2 * q]
                out_ref[0, 2 * q + 1] += accs[2 + 2 * q]

        # Fast path: every row of the block is valid -> no iota/compare/select work.
        @pl.when(row0 + tile_rows <= rows_total)
        def _():
            accumulate(masked=False)

        # Tail path (at most one block per core, plus the clamped block on an odd
        # split): mask rows at/after rows_total.
        @pl.when(row0 + tile_rows > rows_total)
        def _():
            accumulate(masked=True)

    return kernel


def _dice_partial_sums(preds_2d, labels_2d, tile_rows, n_split, vmem_limit):
    """One fused pallas_call streaming labels once for all preds.

    preds_2d: tuple of (rows, 128) arrays; labels_2d: (rows, 128).
    Returns (n_split, 2P+1, 8, 128) f32 partial sums.
    """
    num_preds = len(preds_2d)
    rows_total = labels_2d.shape[0]

    # tile_rows must be a multiple of the sublane count for the per-fold loop.
    tile_rows = max(_SUBLANE, (min(tile_rows, rows_total) // _SUBLANE) * _SUBLANE)
    num_tiles = pl.cdiv(rows_total, tile_rows)
    n_split = n_split if num_tiles >= n_split else 1
    tiles_per_core = pl.cdiv(num_tiles, n_split)
    unroll = max(1, min(_UNROLL, tile_rows // _SUBLANE))

    def data_map(c, i):
        # Clamp so a fully out-of-range (c, i) (odd tile count with the 2-way split)
        # maps to a valid block; its contribution is zeroed in-kernel because there
        # row0 = (c*tiles_per_core + i)*tile_rows >= rows_total (see kernel).
        return (jnp.minimum(c * tiles_per_core + i, num_tiles - 1), 0)

    data_spec = pl.BlockSpec((tile_rows, _LANE), data_map)
    out_spec = pl.BlockSpec((1, 2 * num_preds + 1, _SUBLANE, _LANE),
                            lambda c, i: (c, 0, 0, 0))
    out_shape = jax.ShapeDtypeStruct(
        (n_split, 2 * num_preds + 1, _SUBLANE, _LANE), jnp.float32)
    out_bytes = n_split * (2 * num_preds + 1) * _SUBLANE * _LANE * 4

    in_bytes = sum(int(x.size) * x.dtype.itemsize for x in (*preds_2d, labels_2d))
    cost = pl.CostEstimate(
        flops=int(rows_total) * _LANE * (3 * num_preds + 1),
        transcendentals=0,
        bytes_accessed=in_bytes + out_bytes,
    )

    kernel = _make_dice_kernel(num_preds, tile_rows, rows_total, tiles_per_core,
                               unroll)
    # TODO(synk): on v7x, verify with xprof that the leading "parallel" axis really
    # shards across both TensorCores; if not, switch it to pltpu.CORE_PARALLEL.
    return pl.pallas_call(
        kernel,
        out_shape=out_shape,
        grid_spec=pltpu.PrefetchScalarGridSpec(
            num_scalar_prefetch=0,
            grid=(n_split, tiles_per_core),
            in_specs=[data_spec] * (num_preds + 1),
            out_specs=out_spec,
        ),
        compiler_params=pltpu.CompilerParams(
            dimension_semantics=("parallel", "arbitrary"),
            vmem_limit_bytes=vmem_limit),
        cost_estimate=cost,
    )(*preds_2d, labels_2d)


def _to_lane_slab(x):
    """Flatten to a lane-dense (rows, 128) slab.

    The reduction is order-invariant, so flattening order does not matter.  Rows
    need NOT be a multiple of 8 or of tile_rows: the kernel's tail block masks the
    ragged end in-kernel.  Only a flat length that is not a multiple of 128 pays a
    host pad (of < 128 zeros, which contribute 0 to every sum).
    """
    flat = x.reshape(-1)
    rem = flat.shape[0] % _LANE
    if rem:
        # TODO(synk): ragged numel (% 128 != 0) still pays one host-side pad copy; a
        # fully copy-free path would need a 1-D / ANY-space input with a manual
        # lane-masked tail DMA, which Mosaic handles poorly for this simple reduction.
        flat = jnp.pad(flat, (0, _LANE - rem))
    return flat.reshape(-1, _LANE)


@functools.partial(
    jax.jit,
    static_argnames=("smooth", "weights", "tile_rows", "n_split", "vmem_limit"))
def _dice_loss_impl(preds, labels, smooth, weights, tile_rows, n_split, vmem_limit):
    preds_2d = tuple(_to_lane_slab(p) for p in preds)
    labels_2d = _to_lane_slab(labels)
    partial = _dice_partial_sums(preds_2d, labels_2d, tile_rows, n_split, vmem_limit)
    sums = jnp.sum(partial, axis=(0, 2, 3))            # (2P+1,) tiny final reduce
    num_preds = len(preds)
    lsum = sums[2 * num_preds]
    loss = jnp.float32(0.0)
    for q, w in enumerate(weights):
        inter = sums[2 * q]
        psum = sums[2 * q + 1]
        # smooth == 0 with empty preds+labels gives 0/0 == NaN, same as PyTorch.
        dice = (2.0 * inter + smooth) / (psum + lsum + smooth)
        loss = loss + w * (1.0 - dice)
    return loss


def dice_loss(preds, labels, smooth=0.0, aux_weights=(1.0, 0.4, 0.4),
              tile_rows=None, n_split=None, vmem_limit=None):
    """JAX/Pallas equivalent of DiceLoss.forward."""
    if isinstance(preds, (tuple, list)):
        k = min(len(preds), len(aux_weights))
        preds_t = tuple(preds)[:k]
        weights = tuple(float(w) for w in aux_weights[:k])
    else:
        preds_t = (preds,)
        weights = (1.0,)
    d_tile, d_split, d_vmem = _chip_defaults()
    tile_rows = d_tile if tile_rows is None else int(tile_rows)
    n_split = d_split if n_split is None else int(n_split)
    vmem_limit = d_vmem if vmem_limit is None else int(vmem_limit)
    return _dice_loss_impl(preds_t, labels, float(smooth), weights,
                           tile_rows, n_split, vmem_limit)


if __name__ == "__main__":
    key = jax.random.PRNGKey(0)
    k_p, k_l, k_a1, k_a2 = jax.random.split(key, 4)

    # small shapes consistent with a segmentation head: NCHW = (2, 4, 16, 16)
    shape = (2, 4, 16, 16)
    preds = jax.random.normal(k_p, shape, dtype=jnp.float32)
    labels = (jax.random.uniform(k_l, shape) > 0.5).astype(jnp.float32)

    # single-tensor path
    loss = dice_loss(preds, labels)
    loss = jax.block_until_ready(loss)

    # tuple path (aux outputs) — fused into a single pallas_call
    aux1 = jax.random.normal(k_a1, shape, dtype=jnp.float32)
    aux2 = jax.random.normal(k_a2, shape, dtype=jnp.float32)
    loss_tuple = dice_loss((preds, aux1, aux2), labels)
    loss_tuple = jax.block_until_ready(loss_tuple)

    # reference check in plain JAX
    def ref_single(p, l, smooth=0.0):
        p = p.reshape(-1)
        l = l.reshape(-1)
        inter = jnp.sum(p * l)
        return 1.0 - (2.0 * inter + smooth) / (jnp.sum(p) + jnp.sum(l) + smooth)

    ref = ref_single(preds, labels)
    ref_t = (ref_single(preds, labels)
             + 0.4 * ref_single(aux1, labels)
             + 0.4 * ref_single(aux2, labels))

    assert jnp.allclose(loss, ref, rtol=1e-5, atol=1e-5), (loss, ref)
    assert jnp.allclose(loss_tuple, ref_t, rtol=1e-5, atol=1e-5), (loss_tuple, ref_t)

    print("KERNEL_OK")
</pallas_src>

<mosaic_0001>
module attributes {stable_mosaic.version = 11 : i64} {
  func.func @kernel(%arg0: i32, %arg1: i32, %arg2: memref<16x128xf32, #tpu.memory_space<vmem>>, %arg3: memref<16x128xf32, #tpu.memory_space<vmem>>, %arg4: memref<1x3x8x128xf32, #tpu.memory_space<vmem>>) attributes {dimension_semantics = [#tpu.dimension_semantics<parallel>, #tpu.dimension_semantics<arbitrary>], iteration_bounds = array<i64: 1, 1>, scalar_prefetch = 0 : i64, scratch_operands = 0 : i64, tpu.core_type = #tpu.core_type<tc>, window_params = [{transform_indices = @transform_0, window_bounds = array<i64: 16, 128>}, {transform_indices = @transform_1, window_bounds = array<i64: 16, 128>}, {transform_indices = @transform_2, window_bounds = array<i64: 1, 3, 8, 128>}]} {
    %c0_i32 = arith.constant 0 : i32
    %0 = arith.cmpi eq, %arg1, %c0_i32 : i32
    %1 = arith.extui %0 : i1 to i32
    %c0_i32_0 = arith.constant 0 : i32
    %2 = arith.cmpi ne, %1, %c0_i32_0 : i32
    scf.if %2 {
      %cst = arith.constant 0.000000e+00 : f32
      %14 = vector.broadcast %cst : f32 to vector<1x3x8x128xf32>
      %c0 = arith.constant 0 : index
      %c0_7 = arith.constant 0 : index
      %c0_8 = arith.constant 0 : index
      %c0_9 = arith.constant 0 : index
      %15 = vector.load %arg4[%c0, %c0_7, %c0_8, %c0_9] : memref<1x3x8x128xf32, #tpu.memory_space<vmem>>, vector<1x3x8x128xf32>
      tpu.vector_store %arg4[%c0, %c0_7, %c0_8, %c0_9], %14 {strides = array<i32>} : memref<1x3x8x128xf32, #tpu.memory_space<vmem>>, vector<1x3x8x128xf32>,
    } else {
    }
    %c1_i32 = arith.constant 1 : i32
    %3 = arith.muli %arg0, %c1_i32 : i32
    %4 = arith.addi %3, %arg1 : i32
    %c16_i32 = arith.constant 16 : i32
    %5 = arith.muli %4, %c16_i32 : i32
    %c16_i32_1 = arith.constant 16 : i32
    %6 = arith.addi %5, %c16_i32_1 : i32
    %c16_i32_2 = arith.constant 16 : i32
    %7 = arith.cmpi sle, %6, %c16_i32_2 : i32
    %8 = arith.extui %7 : i1 to i32
    %c0_i32_3 = arith.constant 0 : i32
    %9 = arith.cmpi ne, %8, %c0_i32_3 : i32
    scf.if %9 {
      %cst = arith.constant 0.000000e+00 : f32
      %14 = vector.broadcast %cst : f32 to vector<8x128xf32>
      %cst_7 = arith.constant 0.000000e+00 : f32
      %15 = vector.broadcast %cst_7 : f32 to vector<8x128xf32>
      %cst_8 = arith.constant 0.000000e+00 : f32
      %16 = vector.broadcast %cst_8 : f32 to vector<8x128xf32>
      %c0_i32_9 = arith.constant 0 : i32
      %c8_i32 = arith.constant 8 : i32
      %17 = arith.muli %c0_i32_9, %c8_i32 : i32
      %18 = tpu.assume_multiple %17, 8 : i32
      %19 = arith.index_cast %18 : i32 to index
      %c0 = arith.constant 0 : index
      %20 = vector.load %arg3[%19, %c0] : memref<16x128xf32, #tpu.memory_space<vmem>>, vector<8x128xf32>
      %21 = arith.addf %14, %20 : vector<8x128xf32>
      %22 = arith.index_cast %18 : i32 to index
      %c0_10 = arith.constant 0 : index
      %23 = vector.load %arg2[%22, %c0_10] : memref<16x128xf32, #tpu.memory_space<vmem>>, vector<8x128xf32>
      %24 = arith.mulf %23, %20 : vector<8x128xf32>
      %25 = arith.addf %15, %24 : vector<8x128xf32>
      %26 = arith.addf %16, %23 : vector<8x128xf32>
      %c1_i32_11 = arith.constant 1 : i32
      %c8_i32_12 = arith.constant 8 : i32
      %27 = arith.muli %c1_i32_11, %c8_i32_12 : i32
      %28 = tpu.assume_multiple %27, 8 : i32
      %29 = arith.index_cast %28 : i32 to index
      %c0_13 = arith.constant 0 : index
      %30 = vector.load %arg3[%29, %c0_13] : memref<16x128xf32, #tpu.memory_space<vmem>>, vector<8x128xf32>
      %31 = arith.addf %21, %30 : vector<8x128xf32>
      %32 = arith.index_cast %28 : i32 to index
      %c0_14 = arith.constant 0 : index
      %33 = vector.load %arg2[%32, %c0_14] : memref<16x128xf32, #tpu.memory_space<vmem>>, vector<8x128xf32>
      %34 = arith.mulf %33, %30 : vector<8x128xf32>
      %35 = arith.addf %25, %34 : vector<8x128xf32>
      %36 = arith.addf %26, %33 : vector<8x128xf32>
      %c2_i32 = arith.constant 2 : i32
      %c0_15 = arith.constant 0 : index
      %c2 = arith.constant 2 : index
      %c0_16 = arith.constant 0 : index
      %c0_17 = arith.constant 0 : index
      %37 = vector.load %arg4[%c0_15, %c2, %c0_16, %c0_17] : memref<1x3x8x128xf32, #tpu.memory_space<vmem>>, vector<1x1x8x128xf32>
      %38 = vector.shape_cast %37 : vector<1x1x8x128xf32> to vector<8x128xf32>
      %39 = arith.addf %38, %31 : vector<8x128xf32>
      %c0_18 = arith.constant 0 : index
      %c2_19 = arith.constant 2 : index
      %c0_20 = arith.constant 0 : index
      %c0_21 = arith.constant 0 : index
      %40 = vector.load %arg4[%c0_18, %c2_19, %c0_20, %c0_21] : memref<1x3x8x128xf32, #tpu.memory_space<vmem>>, vector<1x1x8x128xf32>
      %41 = vector.shape_cast %40 : vector<1x1x8x128xf32> to vector<8x128xf32>
      %42 = vector.shape_cast %39 : vector<8x128xf32> to vector<1x1x8x128xf32>
      tpu.vector_store %arg4[%c0_18, %c2_19, %c0_20, %c0_21], %42 {strides = array<i32>} : memref<1x3x8x128xf32, #tpu.memory_space<vmem>>, vector<1x1x8x128xf32>,
      %c0_22 = arith.constant 0 : index
      %c0_23 = arith.constant 0 : index
      %c0_24 = arith.constant 0 : index
      %c0_25 = arith.constant 0 : index
      %43 = vector.load %arg4[%c0_22, %c0_23, %c0_24, %c0_25] : memref<1x3x8x128xf32, #tpu.memory_space<vmem>>, vector<1x1x8x128xf32>
      %44 = vector.shape_cast %43 : vector<1x1x8x128xf32> to vector<8x128xf32>
      %45 = arith.addf %44, %35 : vector<8x128xf32>
      %c0_26 = arith.constant 0 : index
      %c0_27 = arith.constant 0 : index
      %c0_28 = arith.constant 0 : index
      %c0_29 = arith.constant 0 : index
      %46 = vector.load %arg4[%c0_26, %c0_27, %c0_28, %c0_29] : memref<1x3x8x128xf32, #tpu.memory_space<vmem>>, vector<1x1x8x128xf32>
      %47 = vector.shape_cast %46 : vector<1x1x8x128xf32> to vector<8x128xf32>
      %48 = vector.shape_cast %45 : vector<8x128xf32> to vector<1x1x8x128xf32>
      tpu.vector_store %arg4[%c0_26, %c0_27, %c0_28, %c0_29], %48 {strides = array<i32>} : memref<1x3x8x128xf32, #tpu.memory_space<vmem>>, vector<1x1x8x128xf32>,
      %c0_30 = arith.constant 0 : index
      %c1 = arith.constant 1 : index
      %c0_31 = arith.constant 0 : index
      %c0_32 = arith.constant 0 : index
      %49 = vector.load %arg4[%c0_30, %c1, %c0_31, %c0_32] : memref<1x3x8x128xf32, #tpu.memory_space<vmem>>, vector<1x1x8x128xf32>
      %50 = vector.shape_cast %49 : vector<1x1x8x128xf32> to vector<8x128xf32>
      %51 = arith.addf %50, %36 : vector<8x128xf32>
      %c0_33 = arith.constant 0 : index
      %c1_34 = arith.constant 1 : index
      %c0_35 = arith.constant 0 : index
      %c0_36 = arith.constant 0 : index
      %52 = vector.load %arg4[%c0_33, %c1_34, %c0_35, %c0_36] : memref<1x3x8x128xf32, #tpu.memory_space<vmem>>, vector<1x1x8x128xf32>
      %53 = vector.shape_cast %52 : vector<1x1x8x128xf32> to vector<8x128xf32>
      %54 = vector.shape_cast %51 : vector<8x128xf32> to vector<1x1x8x128xf32>
      tpu.vector_store %arg4[%c0_33, %c1_34, %c0_35, %c0_36], %54 {strides = array<i32>} : memref<1x3x8x128xf32, #tpu.memory_space<vmem>>, vector<1x1x8x128xf32>,
    } else {
    }
    %c16_i32_4 = arith.constant 16 : i32
    %10 = arith.addi %5, %c16_i32_4 : i32
    %c16_i32_5 = arith.constant 16 : i32
    %11 = arith.cmpi sgt, %10, %c16_i32_5 : i32
    %12 = arith.extui %11 : i1 to i32
    %c0_i32_6 = arith.constant 0 : i32
    %13 = arith.cmpi ne, %12, %c0_i32_6 : i32
    scf.if %13 {
      %cst = arith.constant 0.000000e+00 : f32
      %14 = vector.broadcast %cst : f32 to vector<8x128xf32>
      %cst_7 = arith.constant 0.000000e+00 : f32
      %15 = vector.broadcast %cst_7 : f32 to vector<8x128xf32>
      %cst_8 = arith.constant 0.000000e+00 : f32
      %16 = vector.broadcast %cst_8 : f32 to vector<8x128xf32>
      %c0_i32_9 = arith.constant 0 : i32
      %c2_i32 = arith.constant 2 : i32
      %17 = arith.addi %c0_i32_9, %c2_i32 : i32
      %c1_i32_10 = arith.constant 1 : i32
      %18:3 = scf.for %arg5 = %c0_i32_9 to %17 step %c1_i32_10 iter_args(%arg6 = %14, %arg7 = %15, %arg8 = %16) -> (vector<8x128xf32>, vector<8x128xf32>, vector<8x128xf32>)  : i32 {
        %c8_i32 = arith.constant 8 : i32
        %37 = arith.muli %arg5, %c8_i32 : i32
        %38 = tpu.assume_multiple %37, 8 : i32
        %39 = arith.index_cast %38 : i32 to index
        %c0_33 = arith.constant 0 : index
        %40 = vector.load %arg3[%39, %c0_33] : memref<16x128xf32, #tpu.memory_space<vmem>>, vector<8x128xf32>
        %41 = tpu.iota {dimensions = array<i32: 0>} : vector<8x128xi32>
        %42 = arith.addi %5, %38 : i32
        %43 = vector.broadcast %42 : i32 to vector<8x128xi32>
        %44 = arith.addi %41, %43 : vector<8x128xi32>
        %c16_i32_34 = arith.constant 16 : i32
        %45 = vector.broadcast %c16_i32_34 : i32 to vector<8x128xi32>
        %46 = arith.cmpi slt, %44, %45 : vector<8x128xi32>
        %cst_35 = arith.constant 0.000000e+00 : f32
        %47 = vector.broadcast %cst_35 : f32 to vector<8x128xf32>
        %48 = arith.select %46, %40, %47 : vector<8x128xi1>, vector<8x128xf32>
        %49 = arith.addf %arg6, %48 : vector<8x128xf32>
        %50 = arith.index_cast %38 : i32 to index
        %c0_36 = arith.constant 0 : index
        %51 = vector.load %arg2[%50, %c0_36] : memref<16x128xf32, #tpu.memory_space<vmem>>, vector<8x128xf32>
        %cst_37 = arith.constant 0.000000e+00 : f32
        %52 = vector.broadcast %cst_37 : f32 to vector<8x128xf32>
        %53 = arith.select %46, %51, %52 : vector<8x128xi1>, vector<8x128xf32>
        %54 = arith.mulf %53, %48 : vector<8x128xf32>
        %55 = arith.addf %arg7, %54 : vector<8x128xf32>
        %56 = arith.addf %arg8, %53 : vector<8x128xf32>
        scf.yield %49, %55, %56 : vector<8x128xf32>, vector<8x128xf32>, vector<8x128xf32>
      }
      %c2_i32_11 = arith.constant 2 : i32
      %c0 = arith.constant 0 : index
      %c2 = arith.constant 2 : index
      %c0_12 = arith.constant 0 : index
      %c0_13 = arith.constant 0 : index
      %19 = vector.load %arg4[%c0, %c2, %c0_12, %c0_13] : memref<1x3x8x128xf32, #tpu.memory_space<vmem>>, vector<1x1x8x128xf32>
      %20 = vector.shape_cast %19 : vector<1x1x8x128xf32> to vector<8x128xf32>
      %21 = arith.addf %20, %18#0 : vector<8x128xf32>
      %c0_14 = arith.constant 0 : index
      %c2_15 = arith.constant 2 : index
      %c0_16 = arith.constant 0 : index
      %c0_17 = arith.constant 0 : index
      %22 = vector.load %arg4[%c0_14, %c2_15, %c0_16, %c0_17] : memref<1x3x8x128xf32, #tpu.memory_space<vmem>>, vector<1x1x8x128xf32>
      %23 = vector.shape_cast %22 : vector<1x1x8x128xf32> to vector<8x128xf32>
      %24 = vector.shape_cast %21 : vector<8x128xf32> to vector<1x1x8x128xf32>
      tpu.vector_store %arg4[%c0_14, %c2_15, %c0_16, %c0_17], %24 {strides = array<i32>} : memref<1x3x8x128xf32, #tpu.memory_space<vmem>>, vector<1x1x8x128xf32>,
      %c0_18 = arith.constant 0 : index
      %c0_19 = arith.constant 0 : index
      %c0_20 = arith.constant 0 : index
      %c0_21 = arith.constant 0 : index
      %25 = vector.load %arg4[%c0_18, %c0_19, %c0_20, %c0_21] : memref<1x3x8x128xf32, #tpu.memory_space<vmem>>, vector<1x1x8x128xf32>
      %26 = vector.shape_cast %25 : vector<1x1x8x128xf32> to vector<8x128xf32>
      %27 = arith.addf %26, %18#1 : vector<8x128xf32>
      %c0_22 = arith.constant 0 : index
      %c0_23 = arith.constant 0 : index
      %c0_24 = arith.constant 0 : index
      %c0_25 = arith.constant 0 : index
      %28 = vector.load %arg4[%c0_22, %c0_23, %c0_24, %c0_25] : memref<1x3x8x128xf32, #tpu.memory_space<vmem>>, vector<1x1x8x128xf32>
      %29 = vector.shape_cast %28 : vector<1x1x8x128xf32> to vector<8x128xf32>
      %30 = vector.shape_cast %27 : vector<8x128xf32> to vector<1x1x8x128xf32>
      tpu.vector_store %arg4[%c0_22, %c0_23, %c0_24, %c0_25], %30 {strides = array<i32>} : memref<1x3x8x128xf32, #tpu.memory_space<vmem>>, vector<1x1x8x128xf32>,
      %c0_26 = arith.constant 0 : index
      %c1 = arith.constant 1 : index
      %c0_27 = arith.constant 0 : index
      %c0_28 = arith.constant 0 : index
      %31 = vector.load %arg4[%c0_26, %c1, %c0_27, %c0_28] : memref<1x3x8x128xf32, #tpu.memory_space<vmem>>, vector<1x1x8x128xf32>
      %32 = vector.shape_cast %31 : vector<1x1x8x128xf32> to vector<8x128xf32>
      %33 = arith.addf %32, %18#2 : vector<8x128xf32>
      %c0_29 = arith.constant 0 : index
      %c1_30 = arith.constant 1 : index
      %c0_31 = arith.constant 0 : index
      %c0_32 = arith.constant 0 : index
      %34 = vector.load %arg4[%c0_29, %c1_30, %c0_31, %c0_32] : memref<1x3x8x128xf32, #tpu.memory_space<vmem>>, vector<1x1x8x128xf32>
      %35 = vector.shape_cast %34 : vector<1x1x8x128xf32> to vector<8x128xf32>
      %36 = vector.shape_cast %33 : vector<8x128xf32> to vector<1x1x8x128xf32>
      tpu.vector_store %arg4[%c0_29, %c1_30, %c0_31, %c0_32], %36 {strides = array<i32>} : memref<1x3x8x128xf32, #tpu.memory_space<vmem>>, vector<1x1x8x128xf32>,
    } else {
    }
    return
  }
  func.func @transform_0(%arg0: i32, %arg1: i32) -> (i32, i32) {
    %c1_i32 = arith.constant 1 : i32
    %0 = arith.muli %arg0, %c1_i32 : i32
    %1 = arith.addi %0, %arg1 : i32
    %c0_i32 = arith.constant 0 : i32
    %2 = arith.minsi %1, %c0_i32 : i32
    %c0_i32_0 = arith.constant 0 : i32
    %c0_i32_1 = arith.constant 0 : i32
    return %2, %c0_i32_0 : i32, i32
  }
  func.func @transform_1(%arg0: i32, %arg1: i32) -> (i32, i32) {
    %c1_i32 = arith.constant 1 : i32
    %0 = arith.muli %arg0, %c1_i32 : i32
    %1 = arith.addi %0, %arg1 : i32
    %c0_i32 = arith.constant 0 : i32
    %2 = arith.minsi %1, %c0_i32 : i32
    %c0_i32_0 = arith.constant 0 : i32
    %c0_i32_1 = arith.constant 0 : i32
    return %2, %c0_i32_0 : i32, i32
  }
  func.func @transform_2(%arg0: i32, %arg1: i32) -> (i32, i32, i32, i32) {
    %c0_i32 = arith.constant 0 : i32
    %c0_i32_0 = arith.constant 0 : i32
    %c0_i32_1 = arith.constant 0 : i32
    %c0_i32_2 = arith.constant 0 : i32
    return %arg0, %c0_i32, %c0_i32_0, %c0_i32_1 : i32, i32, i32, i32
  }
}

</mosaic_0001>

<llo_original>
// kernel: _dice_loss_impl.1
$region0: #{_dice_loss_impl.1}
  #allocation0 [shape = 'u32[]', space=smem, size = 0x4, offset = 0x4, fixed_abs, tag = 'smem constant byte address 0x4 - core index']
  #allocation1 [shape = 'u32[144,128]{1,0:T(1,128)}', space=vmem, size = 0x12000, scoped, tag = 'internal scratch']
  %s0 = inlined_call_operand.vmem [shape: f32[16,128], index: 0, kind: input, shape index: {}]
  %s1 = inlined_call_operand.vmem [shape: f32[16,128], index: 1, kind: input, shape index: {}]
  %s2 = inlined_call_operand.vmem [shape: f32[1,3,8,128], index: 2, kind: output, shape index: {}]
  %s3 = sld [smem:[#allocation0]]
  $region37: #{_dice_loss_impl.1} parent=0
    _
  %s5 = ssub.s32 1, %s3
  %s6 = scalar_select 0, %s5, %s3
  // Predicated region
  $region2: #{_dice_loss_impl.1} parent=0 // pred_check
    _
  $region3: #{_dice_loss_impl.1} parent=0 // pred_check_branch
    %8 = sbr.rel (0) target = $region5
  $region4: #{_dice_loss_impl.1} parent=0 // pred_region
    %s9 = sadd.s32 0, 0
    %p10 = scmp.lt.s32.totalorder %s9, 0
    %s11 = scalar_select %p10, %s9, 0
    %s12 = smul.u32 2, %s11
    %p13 = scmp.lt.s32.totalorder %s12, 1
    %s14 = scalar_select %p13, %s12, 1
    %s15 = smul.addr %s14, 8
    %s16 = scalar_lea.vmem %s0, %s15
    %s17 = sadd.s32 0, 0
    %p18 = scmp.lt.s32.totalorder %s17, 0
    %s19 = scalar_select %p18, %s17, 0
    %s20 = smul.u32 2, %s19
  $region5: #{_dice_loss_impl.1} parent=0 // pred_fallthru
    _
  // Predicated region
  $region6: #{_dice_loss_impl.1} parent=0 // pred_check
    _
  $region7: #{_dice_loss_impl.1} parent=0 // pred_check_branch
    %22 = sbr.rel (0) target = $region9
  $region8: #{_dice_loss_impl.1} parent=0 // pred_region
    %s23 = sadd.s32 0, 0
    %p24 = scmp.lt.s32.totalorder %s23, 0
    %s25 = scalar_select %p24, %s23, 0
    %s26 = smul.u32 2, %s25
    %p27 = scmp.lt.s32.totalorder %s26, 1
    %s28 = scalar_select %p27, %s26, 1
    %s29 = smul.addr %s28, 8
    %s30 = scalar_lea.vmem %s1, %s29
    %s31 = sadd.s32 0, 0
    %p32 = scmp.lt.s32.totalorder %s31, 0
    %s33 = scalar_select %p32, %s31, 0
    %s34 = smul.u32 2, %s33
  $region9: #{_dice_loss_impl.1} parent=0 // pred_fallthru
    _
  %s35 = sadd.s32 0, 0
  %p36 = scmp.lt.s32.totalorder %s35, 0
  %s37 = scalar_select %p36, %s35, 0
  %s38 = smul.u32 2, %s37
  %p39 = scmp.lt.s32.totalorder %s38, 1
  %s40 = scalar_select %p39, %s38, 1
  %s41 = smul.addr %s40, 8
  %s42 = scalar_lea.vmem %s0, %s41
  %s43 = sadd.s32 0, 0
  %p44 = scmp.lt.s32.totalorder %s43, 0
  %s45 = scalar_select %p44, %s43, 0
  %s46 = smul.u32 2, %s45
  %p47 = scmp.lt.s32.totalorder %s46, 1
  %s48 = scalar_select %p47, %s46, 1
  %s49 = smul.addr %s48, 8
  %s50 = scalar_lea.vmem %s1, %s49
  %s51 = sadd.s32 0, 0
  %p52 = scmp.lt.s32.totalorder %s51, 0
  %s53 = scalar_select %p52, %s51, 0
  %s54 = smul.u32 2, %s53
  %p55 = scmp.lt.s32.totalorder %s54, 1
  %s56 = scalar_select %p55, %s54, 1
  %s57 = smul.addr %s56, 8
  %s58 = scalar_lea.vmem %s0, %s57
  %s59 = sadd.s32 0, 0
  %p60 = scmp.lt.s32.totalorder %s59, 0
  %s61 = scalar_select %p60, %s59, 0
  %s62 = smul.u32 2, %s61
  %s63 = sadd.s32 0, 0
  %p64 = scmp.lt.s32.totalorder %s63, 0
  %s65 = scalar_select %p64, %s63, 0
  %s66 = smul.u32 2, %s65
  %p67 = scmp.lt.s32.totalorder %s66, 1
  %s68 = scalar_select %p67, %s66, 1
  %s69 = smul.addr %s68, 8
  %s70 = scalar_lea.vmem %s1, %s69
  %s71 = sadd.s32 0, 0
  %p72 = scmp.lt.s32.totalorder %s71, 0
  %s73 = scalar_select %p72, %s71, 0
  %s74 = smul.u32 2, %s73
  %p75 = scmp.eq.s32.totalorder 0, 0
  // Predicated region
  $region10: #{_dice_loss_impl.1} parent=0 // pred_check
    %p76 = pneg %p75
  $region11: #{_dice_loss_impl.1} parent=0 // pred_check_branch
    %78 = sbr.rel (%p76) target = $region13
  $region12: #{_dice_loss_impl.1} parent=0 // pred_region
    %79 = vst [vmem:[%s2] sm:$0xff] 0.0
    %80 = vst [vmem:[%s2 + $0x8] sm:$0xff] 0.0
    %81 = vst [vmem:[%s2 + $0x10] sm:$0xff] 0.0
  $region13: #{_dice_loss_impl.1} parent=0 // pred_fallthru
    _
  %s82 = sadd.s32 0, 0
  %s83 = smul.u32 %s82, 16
  %s84 = sadd.s32 %s83, 16
  %p85 = scmp.le.s32.totalorder %s84, 16
  // Predicated region
  $region14: #{_dice_loss_impl.1} parent=0 // pred_check
    %p86 = pneg %p85
  $region15: #{_dice_loss_impl.1} parent=0 // pred_check_branch
    %88 = sbr.rel (%p86) target = $region17
  $region16: #{_dice_loss_impl.1} parent=0 // pred_region
    %v89 = vld [vmem:[%s70] sm:$0xff]
    %v90 = vadd.f32 %v89, 0.0
    %v91 = vld [vmem:[%s58] sm:$0xff]
    %v92 = vmul.f32 %v91, %v89
    %v93 = vadd.f32 %v92, 0.0
    %v94 = vadd.f32 %v91, 0.0
    %s95 = scalar_lea.vmem %s70, 8
    %v96 = vld [vmem:[%s95] sm:$0xff]
    %v97 = vadd.f32 %v90, %v96
    %s98 = scalar_lea.vmem %s58, 8
    %v99 = vld [vmem:[%s98] sm:$0xff]
    %v100 = vmul.f32 %v99, %v96
    %v101 = vadd.f32 %v93, %v100
    %v102 = vadd.f32 %v94, %v99
    %s103 = scalar_lea.vmem %s2, 16
    %v104 = vld [vmem:[%s103] sm:$0xff]
    %v105 = vadd.f32 %v104, %v97
    %106 = vst [vmem:[%s103] sm:$0xff] %v105
    %v107 = vld [vmem:[%s2] sm:$0xff]
    %v108 = vadd.f32 %v107, %v101
    %109 = vst [vmem:[%s2] sm:$0xff] %v108
    %s110 = scalar_lea.vmem %s2, 8
    %v111 = vld [vmem:[%s110] sm:$0xff]
    %v112 = vadd.f32 %v111, %v102
    %113 = vst [vmem:[%s110] sm:$0xff] %v112
  $region17: #{_dice_loss_impl.1} parent=0 // pred_fallthru
    _
  %p114 = scmp.gt.s32.totalorder %s84, 16
  // Predicated region
  $region18: #{_dice_loss_impl.1} parent=0 // pred_check
    %p115 = pneg %p114
  $region19: #{_dice_loss_impl.1} parent=0 // pred_check_branch
    %117 = sbr.rel (%p115) target = $region21
  $region20: #{_dice_loss_impl.1} parent=0 // pred_region
    loop: start=0, step=1, limit=2
    $region22: #{_dice_loss_impl.1} parent=20 // loop_pre_header
      _
    $region23: #{_dice_loss_impl.1} parent=20 // loop_header
      %s119 = sphi 0, %s123
      %p120 = scmp.ge.s32.totalorder %s119, 2
      %v124 = vphi 0.0, %v137
      %v125 = vphi 0.0, %v142
      %v126 = vphi 0.0, %v143
    $region24: #{_dice_loss_impl.1} parent=20 // loop_header_branch
      %122 = sbr.rel (%p120) target = $region28
    $region25: #{_dice_loss_impl.1} parent=20 // loop_body
      %s127 = smul.u32 %s119, 8
      %s128 = scalar_lea.vmem %s70, %s127
      %v129 = vld [vmem:[%s128] sm:$0xff]
      %v130 = vlaneseq
      %v131 = vshrl.u32 %v130, 7
      %s132 = sadd.s32 %s83, %s127
      %v133 = vstv %s132
      %v134 = vadd.s32 %v131, %v133
      %vm135 = vcmp.lt.s32.totalorder %v134, 16
      %v136 = vsel %vm135, %v129, 0.0
      %v137 = vadd.f32 %v124, %v136
      %s138 = scalar_lea.vmem %s58, %s127
      %v139 = vld [vmem:[%s138] sm:$0xff]
      %v140 = vsel %vm135, %v139, 0.0
      %v141 = vmul.f32 %v140, %v136
      %v142 = vadd.f32 %v125, %v141
      %v143 = vadd.f32 %v126, %v140
    $region26: #{_dice_loss_impl.1} parent=20 // loop_footer
      %s123 = sadd.s32 1, %s119
    $region27: #{_dice_loss_impl.1} parent=20 // loop_footer_branch
      %118 = sbr.rel target = $region23
    $region28: #{_dice_loss_impl.1} parent=20 // loop_exit
      _
    %s144 = scalar_lea.vmem %s2, 16
    %v145 = vld [vmem:[%s144] sm:$0xff]
    %v146 = vadd.f32 %v145, %v124
    %147 = vst [vmem:[%s144] sm:$0xff] %v146
    %v148 = vld [vmem:[%s2] sm:$0xff]
    %v149 = vadd.f32 %v148, %v125
    %150 = vst [vmem:[%s2] sm:$0xff] %v149
    %s151 = scalar_lea.vmem %s2, 8
    %v152 = vld [vmem:[%s151] sm:$0xff]
    %v153 = vadd.f32 %v152, %v126
    %154 = vst [vmem:[%s151] sm:$0xff] %v153
  $region21: #{_dice_loss_impl.1} parent=0 // pred_fallthru
    _
  // Predicated region
  $region29: #{_dice_loss_impl.1} parent=0 // pred_check
    _
  $region30: #{_dice_loss_impl.1} parent=0 // pred_check_branch
    %156 = sbr.rel (0) target = $region32
  $region31: #{_dice_loss_impl.1} parent=0 // pred_region
    _
  $region32: #{_dice_loss_impl.1} parent=0 // pred_fallthru
    _
  // Predicated region
  $region33: #{_dice_loss_impl.1} parent=0 // pred_check
    _
  $region34: #{_dice_loss_impl.1} parent=0 // pred_check_branch
    %158 = sbr.rel (0) target = $region36
  $region35: #{_dice_loss_impl.1} parent=0 // pred_region
    _
  $region36: #{_dice_loss_impl.1} parent=0 // pred_fallthru
    _

</llo_original>
